<compile_context>
chip_gen: v5e
topology: v5e:2x2
jax: 0.10.0
libtpu: 0.0.40
codegen_flags: <defaults>
</compile_context>

<pallas_src>
import math

import jax
import jax.numpy as jnp
from jax.experimental import pallas as pl
from jax.experimental.pallas import tpu as pltpu


def _make_attention_kernel(num_heads: int, head_size: int, seq_len: int, q_tile: int):
    scale = 1.0 / math.sqrt(head_size)

    def kernel(x_ref, wq_ref, wk_ref, wv_ref, bq_ref, bv_ref, mask_ref, o_ref):
        qi = pl.program_id(1)

        # Full sequence (for K/V) and the current query-row tile (for Q).
        x_full = x_ref[0].astype(jnp.bfloat16)                          # (S, H)
        row0 = pl.multiple_of(qi * q_tile, q_tile)
        x_q = x_ref[0, pl.ds(row0, q_tile), :].astype(jnp.bfloat16)     # (TQ, H)

        wq = wq_ref[...]        # bf16 (H, A)
        wk = wk_ref[...]
        wv = wv_ref[...]

        # QKV projections: bf16 operands, f32 accumulation.
        # (key has NO bias, matching nn.functional.linear(hidden, key.weight))
        q = jnp.dot(x_q, wq, preferred_element_type=jnp.float32) + bq_ref[...]   # (TQ, A)
        k = jnp.dot(x_full, wk, preferred_element_type=jnp.float32)              # (S, A)
        v = jnp.dot(x_full, wv, preferred_element_type=jnp.float32) + bv_ref[...]  # (S, A)

        # get_extended_attention_mask: 1 -> 0, 0 -> -10000 (broadcast over heads).
        ext_mask = (1.0 - mask_ref[0].astype(jnp.float32)) * -10000.0   # (TQ, S)

        # Per-head attention; num_heads is small (default 1 in the module),
        # so a static unroll is fine. Contexts are gathered and stored once.
        ctxs = []
        for h in range(num_heads):
            lo = h * head_size
            qh = (q[:, lo:lo + head_size] * scale).astype(jnp.bfloat16)  # (TQ, hd)
            kh = k[:, lo:lo + head_size].astype(jnp.bfloat16)            # (S,  hd)
            vh = v[:, lo:lo + head_size].astype(jnp.bfloat16)            # (S,  hd)

            # scores without materializing kh.T (contract both last dims).
            s = jax.lax.dot_general(
                qh, kh, dimension_numbers=(((1,), (1,)), ((), ())),
                preferred_element_type=jnp.float32)                      # (TQ, S)
            s = s + ext_mask

            # Numerically-stable softmax along the last axis.
            m = jnp.max(s, axis=-1, keepdims=True)
            p = jnp.exp(s - m)
            p = p * pl.reciprocal(jnp.sum(p, axis=-1, keepdims=True), approx=True)

            ctxs.append(jnp.dot(p.astype(jnp.bfloat16), vh,
                                preferred_element_type=jnp.float32))     # (TQ, hd)

        # Single lane-dense store of width A (= num_heads * head_size).
        out = ctxs[0] if num_heads == 1 else jnp.concatenate(ctxs, axis=-1)
        o_ref[0] = out.astype(o_ref.dtype)

    return kernel


def global_graph_forward(hidden_states, attention_mask, wq, bq, wk, wv, bv,
                         *, num_heads, head_size, q_tile=None):
    """Pallas implementation of GlobalGraph.forward (return_scores=False).

    hidden_states : (B, S, H) f32
    attention_mask: (B, S, S) f32  (1 = attend, 0 = masked)
    wq, wk, wv    : (H, A) f32  with A = num_heads * head_size
    bq, bv        : (1, A) f32  (key projection has no bias)
    returns       : (B, S, A) f32
    """
    B, S, H = hidden_states.shape
    A = num_heads * head_size

    # Pick a query tile: bounds per-step VMEM to O(TQ*S) and gives megacore a
    # second parallel axis. K/V are re-projected per tile (full x stays
    # resident), which keeps both grid axes "parallel".
    if q_tile is None:
        q_tile = S
        for cand in (512, 256, 128):
            if S % cand == 0:
                q_tile = cand
                break
    assert S % q_tile == 0, "seq_len must be divisible by q_tile"
    n_qt = S // q_tile

    # Halve HBM traffic for the biggest streams: mask + weights as bf16
    # (values 0/1 and small weights are representable; accumulation is f32).
    wq_b = wq.astype(jnp.bfloat16)
    wk_b = wk.astype(jnp.bfloat16)
    wv_b = wv.astype(jnp.bfloat16)
    mask_b = attention_mask.astype(jnp.bfloat16)

    kernel = _make_attention_kernel(num_heads, head_size, S, q_tile)

    # Explicit VMEM budget from the block footprint (x + weights + mask + out,
    # double buffered) plus q/k/v/score intermediates, with headroom; clamped
    # to a range that is valid on v5e/v6e/v7x.
    f32, bf16 = 4, 2
    block_bytes = (S * H * f32 + 3 * H * A * bf16 + 2 * A * f32
                   + q_tile * S * bf16 + q_tile * A * f32)
    interm_bytes = (3 * S * A * f32 + 2 * q_tile * S * f32 + 2 * q_tile * A * f32)
    vmem_limit = int(min(max(2 * block_bytes + interm_bytes + (8 << 20), 32 << 20),
                         64 << 20))

    return pl.pallas_call(
        kernel,
        out_shape=jax.ShapeDtypeStruct((B, S, A), jnp.float32),
        grid_spec=pltpu.PrefetchScalarGridSpec(
            num_scalar_prefetch=0,
            grid=(B, n_qt),
            in_specs=[
                pl.BlockSpec((1, S, H), lambda b, t: (b, 0, 0)),       # hidden_states
                pl.BlockSpec((H, A), lambda b, t: (0, 0)),             # wq (bf16)
                pl.BlockSpec((H, A), lambda b, t: (0, 0)),             # wk (bf16)
                pl.BlockSpec((H, A), lambda b, t: (0, 0)),             # wv (bf16)
                pl.BlockSpec((1, A), lambda b, t: (0, 0)),             # bq
                pl.BlockSpec((1, A), lambda b, t: (0, 0)),             # bv
                pl.BlockSpec((1, q_tile, S), lambda b, t: (b, t, 0)),  # mask (bf16)
            ],
            out_specs=pl.BlockSpec((1, q_tile, A), lambda b, t: (b, t, 0)),
        ),
        compiler_params=pltpu.CompilerParams(
            dimension_semantics=("parallel", "parallel"),
            vmem_limit_bytes=vmem_limit),
    )(hidden_states, wq_b, wk_b, wv_b, bq, bv, mask_b)


def _reference(hidden_states, attention_mask, wq, bq, wk, wv, bv,
               *, num_heads, head_size):
    """Plain-JAX f32 reference mirroring the PyTorch forward."""
    B, S, H = hidden_states.shape
    q = hidden_states @ wq + bq                        # (B, S, A)
    k = hidden_states @ wk                             # (B, S, A)  no bias
    v = hidden_states @ wv + bv                        # (B, S, A)

    def split(x):
        return x.reshape(B, S, num_heads, head_size).transpose(0, 2, 1, 3)

    qh, kh, vh = split(q), split(k), split(v)          # (B, nh, S, hd)
    scores = jnp.einsum("bhqd,bhkd->bhqk", qh / math.sqrt(head_size), kh)
    ext = ((1.0 - attention_mask) * -10000.0)[:, None, :, :]
    scores = scores + ext
    probs = jax.nn.softmax(scores, axis=-1)
    ctx = jnp.einsum("bhqk,bhkd->bhqd", probs, vh)
    return ctx.transpose(0, 2, 1, 3).reshape(B, S, num_heads * head_size)


if __name__ == "__main__":
    # Small shapes consistent with the module.
    B, S, H = 2, 8, 32
    num_heads = 2
    head_size = H // num_heads          # attention_head_size = hidden // heads
    A = num_heads * head_size

    key = jax.random.PRNGKey(0)
    k_x, k_m, k_wq, k_wk, k_wv, k_bq, k_bv = jax.random.split(key, 7)

    hidden_states = jax.random.normal(k_x, (B, S, H), dtype=jnp.float32)

    # attention_mask: 1 = attend, 0 = masked (keep at least the first column
    # attendable so softmax rows are well-defined).
    mask_bits = (jax.random.uniform(k_m, (B, S, S)) > 0.3).astype(jnp.float32)
    attention_mask = mask_bits.at[:, :, 0].set(1.0)

    # Deterministic parameter init (synthetic; weights passed as (in, out)).
    bound = 1.0 / math.sqrt(H)
    wq = jax.random.uniform(k_wq, (H, A), minval=-bound, maxval=bound, dtype=jnp.float32)
    wk = jax.random.uniform(k_wk, (H, A), minval=-bound, maxval=bound, dtype=jnp.float32)
    wv = jax.random.uniform(k_wv, (H, A), minval=-bound, maxval=bound, dtype=jnp.float32)
    bq = jax.random.uniform(k_bq, (1, A), minval=-bound, maxval=bound, dtype=jnp.float32)
    bv = jax.random.uniform(k_bv, (1, A), minval=-bound, maxval=bound, dtype=jnp.float32)

    out = global_graph_forward(hidden_states, attention_mask, wq, bq, wk, wv, bv,
                               num_heads=num_heads, head_size=head_size)
    out = jax.block_until_ready(out)

    ref = _reference(hidden_states, attention_mask, wq, bq, wk, wv, bv,
                     num_heads=num_heads, head_size=head_size)
    assert out.shape == (B, S, A)
    # bf16 matmul operands + approx reciprocal => slightly loosened tolerance
    # vs. the f32 reference.
    assert jnp.allclose(out, ref, atol=3e-2, rtol=3e-2), "mismatch vs reference"

    print("KERNEL_OK")
</pallas_src>

<mosaic_0001>
module attributes {stable_mosaic.version = 11 : i64} {
  func.func @kernel(%arg0: i32, %arg1: i32, %arg2: memref<1x8x32xf32, #tpu.memory_space<vmem>>, %arg3: memref<32x32xbf16, #tpu.memory_space<vmem>>, %arg4: memref<32x32xbf16, #tpu.memory_space<vmem>>, %arg5: memref<32x32xbf16, #tpu.memory_space<vmem>>, %arg6: memref<1x32xf32, #tpu.memory_space<vmem>>, %arg7: memref<1x32xf32, #tpu.memory_space<vmem>>, %arg8: memref<1x8x8xbf16, #tpu.memory_space<vmem>>, %arg9: memref<1x8x32xf32, #tpu.memory_space<vmem>>) attributes {dimension_semantics = [#tpu.dimension_semantics<parallel>, #tpu.dimension_semantics<parallel>], iteration_bounds = array<i64: 2, 1>, scalar_prefetch = 0 : i64, scratch_operands = 0 : i64, tpu.core_type = #tpu.core_type<tc>, window_params = [{transform_indices = @transform_0, window_bounds = array<i64: 1, 8, 32>}, {pipeline_mode = #tpu.pipeline_mode<synchronous>, transform_indices = @transform_1, window_bounds = array<i64: 32, 32>}, {pipeline_mode = #tpu.pipeline_mode<synchronous>, transform_indices = @transform_2, window_bounds = array<i64: 32, 32>}, {pipeline_mode = #tpu.pipeline_mode<synchronous>, transform_indices = @transform_3, window_bounds = array<i64: 32, 32>}, {pipeline_mode = #tpu.pipeline_mode<synchronous>, transform_indices = @transform_4, window_bounds = array<i64: 1, 32>}, {pipeline_mode = #tpu.pipeline_mode<synchronous>, transform_indices = @transform_5, window_bounds = array<i64: 1, 32>}, {transform_indices = @transform_6, window_bounds = array<i64: 1, 8, 8>}, {transform_indices = @transform_7, window_bounds = array<i64: 1, 8, 32>}]} {
    %c0 = arith.constant 0 : index
    %c0_0 = arith.constant 0 : index
    %c0_1 = arith.constant 0 : index
    %0 = vector.load %arg2[%c0, %c0_0, %c0_1] : memref<1x8x32xf32, #tpu.memory_space<vmem>>, vector<1x8x32xf32>
    %1 = vector.shape_cast %0 : vector<1x8x32xf32> to vector<8x32xf32>
    %2 = arith.truncf %1 : vector<8x32xf32> to vector<8x32xbf16>
    %c8_i32 = arith.constant 8 : i32
    %3 = arith.muli %arg1, %c8_i32 : i32
    %4 = tpu.assume_multiple %3, 8 : i32
    %c0_2 = arith.constant 0 : index
    %5 = arith.index_cast %4 : i32 to index
    %c0_3 = arith.constant 0 : index
    %6 = vector.load %arg2[%c0_2, %5, %c0_3] : memref<1x8x32xf32, #tpu.memory_space<vmem>>, vector<1x8x32xf32>
    %7 = vector.shape_cast %6 : vector<1x8x32xf32> to vector<8x32xf32>
    %8 = arith.truncf %7 : vector<8x32xf32> to vector<8x32xbf16>
    %c0_4 = arith.constant 0 : index
    %c0_5 = arith.constant 0 : index
    %9 = vector.load %arg3[%c0_4, %c0_5] : memref<32x32xbf16, #tpu.memory_space<vmem>>, vector<32x32xbf16>
    %c0_6 = arith.constant 0 : index
    %c0_7 = arith.constant 0 : index
    %10 = vector.load %arg4[%c0_6, %c0_7] : memref<32x32xbf16, #tpu.memory_space<vmem>>, vector<32x32xbf16>
    %c0_8 = arith.constant 0 : index
    %c0_9 = arith.constant 0 : index
    %11 = vector.load %arg5[%c0_8, %c0_9] : memref<32x32xbf16, #tpu.memory_space<vmem>>, vector<32x32xbf16>
    %cst = arith.constant dense<0.000000e+00> : vector<8x32xf32>
    %12 = tpu.matmul %8, %9, %cst {dimension_numbers = #tpu.dot_dimension_numbers<[1], [0], [0], [1], [0, 0, 1, 1], [], []>} : vector<8x32xbf16>, vector<32x32xbf16>, vector<8x32xf32> -> vector<8x32xf32>
    %c0_10 = arith.constant 0 : index
    %c0_11 = arith.constant 0 : index
    %13 = vector.load %arg6[%c0_10, %c0_11] : memref<1x32xf32, #tpu.memory_space<vmem>>, vector<1x32xf32>
    %14 = vector.broadcast %13 : vector<1x32xf32> to vector<8x32xf32>
    %15 = arith.addf %12, %14 : vector<8x32xf32>
    %cst_12 = arith.constant dense<0.000000e+00> : vector<8x32xf32>
    %16 = tpu.matmul %2, %10, %cst_12 {dimension_numbers = #tpu.dot_dimension_numbers<[1], [0], [0], [1], [0, 0, 1, 1], [], []>} : vector<8x32xbf16>, vector<32x32xbf16>, vector<8x32xf32> -> vector<8x32xf32>
    %cst_13 = arith.constant dense<0.000000e+00> : vector<8x32xf32>
    %17 = tpu.matmul %2, %11, %cst_13 {dimension_numbers = #tpu.dot_dimension_numbers<[1], [0], [0], [1], [0, 0, 1, 1], [], []>} : vector<8x32xbf16>, vector<32x32xbf16>, vector<8x32xf32> -> vector<8x32xf32>
    %c0_14 = arith.constant 0 : index
    %c0_15 = arith.constant 0 : index
    %18 = vector.load %arg7[%c0_14, %c0_15] : memref<1x32xf32, #tpu.memory_space<vmem>>, vector<1x32xf32>
    %19 = vector.broadcast %18 : vector<1x32xf32> to vector<8x32xf32>
    %20 = arith.addf %17, %19 : vector<8x32xf32>
    %c0_16 = arith.constant 0 : index
    %c0_17 = arith.constant 0 : index
    %c0_18 = arith.constant 0 : index
    %21 = vector.load %arg8[%c0_16, %c0_17, %c0_18] : memref<1x8x8xbf16, #tpu.memory_space<vmem>>, vector<1x8x8xbf16>
    %22 = vector.shape_cast %21 : vector<1x8x8xbf16> to vector<8x8xbf16>
    %23 = arith.extf %22 : vector<8x8xbf16> to vector<8x8xf32>
    %cst_19 = arith.constant 1.000000e+00 : f32
    %24 = vector.broadcast %cst_19 : f32 to vector<8x8xf32>
    %25 = arith.subf %24, %23 : vector<8x8xf32>
    %cst_20 = arith.constant -1.000000e+04 : f32
    %26 = vector.broadcast %cst_20 : f32 to vector<8x8xf32>
    %27 = arith.mulf %25, %26 : vector<8x8xf32>
    %28 = vector.extract_strided_slice %15 {offsets = [0, 0], sizes = [8, 16], strides = [1, 1]} : vector<8x32xf32> to vector<8x16xf32>
    %cst_21 = arith.constant 2.500000e-01 : f32
    %29 = vector.broadcast %cst_21 : f32 to vector<8x16xf32>
    %30 = arith.mulf %28, %29 : vector<8x16xf32>
    %31 = arith.truncf %30 : vector<8x16xf32> to vector<8x16xbf16>
    %32 = vector.extract_strided_slice %16 {offsets = [0, 0], sizes = [8, 16], strides = [1, 1]} : vector<8x32xf32> to vector<8x16xf32>
    %33 = arith.truncf %32 : vector<8x16xf32> to vector<8x16xbf16>
    %34 = vector.extract_strided_slice %20 {offsets = [0, 0], sizes = [8, 16], strides = [1, 1]} : vector<8x32xf32> to vector<8x16xf32>
    %35 = arith.truncf %34 : vector<8x16xf32> to vector<8x16xbf16>
    %cst_22 = arith.constant dense<0.000000e+00> : vector<8x8xf32>
    %36 = tpu.matmul %31, %33, %cst_22 {dimension_numbers = #tpu.dot_dimension_numbers<[1], [1], [0], [0], [0, 0, 1, 0], [], []>} : vector<8x16xbf16>, vector<8x16xbf16>, vector<8x8xf32> -> vector<8x8xf32>
    %37 = arith.addf %36, %27 : vector<8x8xf32>
    %cst_23 = arith.constant dense<0xFF800000> : vector<8xf32>
    %38 = vector.multi_reduction <maximumf>, %37, %cst_23 [1] : vector<8x8xf32> to vector<8xf32>
    %39 = vector.shape_cast %38 : vector<8xf32> to vector<8x1xf32>
    %40 = vector.broadcast %39 : vector<8x1xf32> to vector<8x8xf32>
    %41 = arith.subf %37, %40 : vector<8x8xf32>
    %42 = math.exp %41 : vector<8x8xf32>
    %cst_24 = arith.constant dense<0.000000e+00> : vector<8xf32>
    %43 = vector.multi_reduction <add>, %42, %cst_24 [1] : vector<8x8xf32> to vector<8xf32>
    %44 = vector.shape_cast %43 : vector<8xf32> to vector<8x1xf32>
    %45 = tpu.reciprocal %44 {approx = true} : vector<8x1xf32> -> vector<8x1xf32>
    %46 = vector.broadcast %45 : vector<8x1xf32> to vector<8x8xf32>
    %47 = arith.mulf %42, %46 : vector<8x8xf32>
    %48 = arith.truncf %47 : vector<8x8xf32> to vector<8x8xbf16>
    %cst_25 = arith.constant dense<0.000000e+00> : vector<8x16xf32>
    %49 = tpu.matmul %48, %35, %cst_25 {dimension_numbers = #tpu.dot_dimension_numbers<[1], [0], [0], [1], [0, 0, 1, 1], [], []>} : vector<8x8xbf16>, vector<8x16xbf16>, vector<8x16xf32> -> vector<8x16xf32>
    %50 = vector.extract_strided_slice %15 {offsets = [0, 16], sizes = [8, 16], strides = [1, 1]} : vector<8x32xf32> to vector<8x16xf32>
    %cst_26 = arith.constant 2.500000e-01 : f32
    %51 = vector.broadcast %cst_26 : f32 to vector<8x16xf32>
    %52 = arith.mulf %50, %51 : vector<8x16xf32>
    %53 = arith.truncf %52 : vector<8x16xf32> to vector<8x16xbf16>
    %54 = vector.extract_strided_slice %16 {offsets = [0, 16], sizes = [8, 16], strides = [1, 1]} : vector<8x32xf32> to vector<8x16xf32>
    %55 = arith.truncf %54 : vector<8x16xf32> to vector<8x16xbf16>
    %56 = vector.extract_strided_slice %20 {offsets = [0, 16], sizes = [8, 16], strides = [1, 1]} : vector<8x32xf32> to vector<8x16xf32>
    %57 = arith.truncf %56 : vector<8x16xf32> to vector<8x16xbf16>
    %cst_27 = arith.constant dense<0.000000e+00> : vector<8x8xf32>
    %58 = tpu.matmul %53, %55, %cst_27 {dimension_numbers = #tpu.dot_dimension_numbers<[1], [1], [0], [0], [0, 0, 1, 0], [], []>} : vector<8x16xbf16>, vector<8x16xbf16>, vector<8x8xf32> -> vector<8x8xf32>
    %59 = arith.addf %58, %27 : vector<8x8xf32>
    %cst_28 = arith.constant dense<0xFF800000> : vector<8xf32>
    %60 = vector.multi_reduction <maximumf>, %59, %cst_28 [1] : vector<8x8xf32> to vector<8xf32>
    %61 = vector.shape_cast %60 : vector<8xf32> to vector<8x1xf32>
    %62 = vector.broadcast %61 : vector<8x1xf32> to vector<8x8xf32>
    %63 = arith.subf %59, %62 : vector<8x8xf32>
    %64 = math.exp %63 : vector<8x8xf32>
    %cst_29 = arith.constant dense<0.000000e+00> : vector<8xf32>
    %65 = vector.multi_reduction <add>, %64, %cst_29 [1] : vector<8x8xf32> to vector<8xf32>
    %66 = vector.shape_cast %65 : vector<8xf32> to vector<8x1xf32>
    %67 = tpu.reciprocal %66 {approx = true} : vector<8x1xf32> -> vector<8x1xf32>
    %68 = vector.broadcast %67 : vector<8x1xf32> to vector<8x8xf32>
    %69 = arith.mulf %64, %68 : vector<8x8xf32>
    %70 = arith.truncf %69 : vector<8x8xf32> to vector<8x8xbf16>
    %cst_30 = arith.constant dense<0.000000e+00> : vector<8x16xf32>
    %71 = tpu.matmul %70, %57, %cst_30 {dimension_numbers = #tpu.dot_dimension_numbers<[1], [0], [0], [1], [0, 0, 1, 1], [], []>} : vector<8x8xbf16>, vector<8x16xbf16>, vector<8x16xf32> -> vector<8x16xf32>
    %72 = tpu.concatenate %49, %71 in 1 : vector<8x16xf32>, vector<8x16xf32> -> vector<8x32xf32>
    %c0_31 = arith.constant 0 : index
    %c0_32 = arith.constant 0 : index
    %c0_33 = arith.constant 0 : index
    %73 = vector.load %arg9[%c0_31, %c0_32, %c0_33] : memref<1x8x32xf32, #tpu.memory_space<vmem>>, vector<1x8x32xf32>
    %74 = vector.shape_cast %73 : vector<1x8x32xf32> to vector<8x32xf32>
    %75 = vector.shape_cast %72 : vector<8x32xf32> to vector<1x8x32xf32>
    tpu.vector_store %arg9[%c0_31, %c0_32, %c0_33], %75 {strides = array<i32>} : memref<1x8x32xf32, #tpu.memory_space<vmem>>, vector<1x8x32xf32>,
    return
  }
  func.func @transform_0(%arg0: i32, %arg1: i32) -> (i32, i32, i32) {
    %c0_i32 = arith.constant 0 : i32
    %c0_i32_0 = arith.constant 0 : i32
    %c0_i32_1 = arith.constant 0 : i32
    return %arg0, %c0_i32, %c0_i32_0 : i32, i32, i32
  }
  func.func @transform_1(%arg0: i32, %arg1: i32) -> (i32, i32) {
    %c0_i32 = arith.constant 0 : i32
    %c0_i32_0 = arith.constant 0 : i32
    %c0_i32_1 = arith.constant 0 : i32
    return %c0_i32, %c0_i32_0 : i32, i32
  }
  func.func @transform_2(%arg0: i32, %arg1: i32) -> (i32, i32) {
    %c0_i32 = arith.constant 0 : i32
    %c0_i32_0 = arith.constant 0 : i32
    %c0_i32_1 = arith.constant 0 : i32
    return %c0_i32, %c0_i32_0 : i32, i32
  }
  func.func @transform_3(%arg0: i32, %arg1: i32) -> (i32, i32) {
    %c0_i32 = arith.constant 0 : i32
    %c0_i32_0 = arith.constant 0 : i32
    %c0_i32_1 = arith.constant 0 : i32
    return %c0_i32, %c0_i32_0 : i32, i32
  }
  func.func @transform_4(%arg0: i32, %arg1: i32) -> (i32, i32) {
    %c0_i32 = arith.constant 0 : i32
    %c0_i32_0 = arith.constant 0 : i32
    %c0_i32_1 = arith.constant 0 : i32
    return %c0_i32, %c0_i32_0 : i32, i32
  }
  func.func @transform_5(%arg0: i32, %arg1: i32) -> (i32, i32) {
    %c0_i32 = arith.constant 0 : i32
    %c0_i32_0 = arith.constant 0 : i32
    %c0_i32_1 = arith.constant 0 : i32
    return %c0_i32, %c0_i32_0 : i32, i32
  }
  func.func @transform_6(%arg0: i32, %arg1: i32) -> (i32, i32, i32) {
    %c0_i32 = arith.constant 0 : i32
    %c0_i32_0 = arith.constant 0 : i32
    return %arg0, %arg1, %c0_i32 : i32, i32, i32
  }
  func.func @transform_7(%arg0: i32, %arg1: i32) -> (i32, i32, i32) {
    %c0_i32 = arith.constant 0 : i32
    %c0_i32_0 = arith.constant 0 : i32
    return %arg0, %arg1, %c0_i32 : i32, i32, i32
  }
}

</mosaic_0001>

<llo_original>
// kernel: tpu_custom_call.1
$region0: #{tpu_custom_call.1}
  #allocation0 [shape = 'u32[]', space=smem, size = 0x4, offset = 0x4, fixed_abs, tag = 'smem constant byte address 0x4 - core index']
  #allocation1 [shape = 'u32[72,128]{1,0:T(1,128)}', space=vmem, size = 0x9000, scoped, tag = 'internal scratch']
  %s0 = inlined_call_operand.hbm [shape: f32[2,8,32], index: 0, kind: input, shape index: {}]
  %s1 = inlined_call_operand.hbm [shape: bf16[32,32], index: 1, kind: input, shape index: {}]
  %s2 = inlined_call_operand.hbm [shape: bf16[32,32], index: 2, kind: input, shape index: {}]
  %s3 = inlined_call_operand.hbm [shape: bf16[32,32], index: 3, kind: input, shape index: {}]
  %s4 = inlined_call_operand.vmem [shape: f32[1,32], index: 4, kind: input, shape index: {}]
  %s5 = inlined_call_operand.vmem [shape: f32[1,32], index: 5, kind: input, shape index: {}]
  %s6 = inlined_call_operand.hbm [shape: bf16[2,8,8], index: 6, kind: input, shape index: {}]
  %s7 = inlined_call_operand.hbm [shape: f32[2,8,32], index: 7, kind: output, shape index: {}]
  %s8 = sld [smem:[#allocation0]]
  $region81: #{tpu_custom_call.1} parent=0
    _
  %s10 = ssub.s32 1, %s8
  %s11 = scalar_select 0, %s10, %s8
  $region1: #{tpu_custom_call.1} parent=0
    #allocation2 [shape = 'u8[8192]{0}', space=vmem, size = 0x2000, scoped, tag = 'input window, operand 0']
    #allocation3 [shape = 's32[2]{0}', space=sflag, size = 0x8, scoped, tag = 'scoped memory for tpu_custom_call.1']
    #allocation4 [shape = 's32[2]{0}', space=sflag, size = 0x8, scoped, tag = 'scoped memory for tpu_custom_call.1']
    #allocation5 [shape = 'u8[8192]{0}', space=vmem, size = 0x2000, scoped, tag = 'input window, operand 1, single buffered']
    #allocation6 [shape = 's32[1]{0}', space=sflag, size = 0x4, scoped, tag = 'scoped memory for tpu_custom_call.1']
    #allocation7 [shape = 'u8[8192]{0}', space=vmem, size = 0x2000, scoped, tag = 'input window, operand 2, single buffered']
    #allocation8 [shape = 'u8[8192]{0}', space=vmem, size = 0x2000, scoped, tag = 'input window, operand 3, single buffered']
    #allocation9 [shape = 's32[1]{0}', space=sflag, size = 0x4, scoped, tag = 'scoped memory for tpu_custom_call.1']
    #allocation10 [shape = 'u8[4096]{0}', space=vmem, size = 0x1000, scoped, tag = 'input window, operand 6']
    #allocation11 [shape = 'u8[8192]{0}', space=vmem, size = 0x2000, scoped, tag = 'output window, operand 0']
    %12 = vsyncpa [#allocation3], 0
    %s13 = scalar_lea.sflag [#allocation3], 1
    %14 = vsyncpa %s13, 0
    %15 = vsyncpa [#allocation6], 0
    %16 = vsyncpa [#allocation9], 0
    %17 = vsyncpa [#allocation4], 0
    %s18 = scalar_lea.sflag [#allocation4], 1
    %19 = vsyncpa %s18, 0
    loop: start=0, step=1, limit=4
    $region2: #{tpu_custom_call.1} parent=1 // loop_pre_header
      _
    $region3: #{tpu_custom_call.1} parent=1 // loop_header
      %s21 = sphi 0, %s25
      %p22 = scmp.ge.s32.totalorder %s21, 4
      %s28 = sphi 0, %s40
      %s29 = sphi 0, %s36
      %s30 = sphi 0, %s28
      %s31 = sphi 0, %s29
      %s32 = sphi 0, %s30
      %s33 = sphi 0, %s31
      %s43 = sphi 0, %s45
      %s46 = sphi 0, %s43
      %s47 = sphi 0, %s46
      %s63 = sphi 0, %s47
      %s67 = sphi 0, %s67
      %s69 = sphi 0, %s67
      %s70 = sphi 0, %s69
      %s84 = sphi 0, %s70
      %s88 = sphi 0, %s88
      %s90 = sphi 0, %s88
      %s91 = sphi 0, %s90
      %s105 = sphi 0, %s91
      %s109 = sphi 0, %s109
      %s111 = sphi 0, %s109
      %s112 = sphi 0, %s111
      %s126 = sphi 0, %s112
      %s130 = sphi 0, %s130
      %s132 = sphi 0, %s130
      %s133 = sphi 0, %s132
      %s147 = sphi 0, %s133
      %s151 = sphi 0, %s151
      %s153 = sphi 0, %s151
      %s154 = sphi 0, %s153
      %s168 = sphi 0, %s154
      %s176 = sphi 0, %s178
      %s179 = sphi 0, %s176
      %s180 = sphi 0, %s179
      %s196 = sphi 0, %s180
      %s204 = sphi 0, %s206
      %s207 = sphi 0, %s204
      %s208 = sphi 0, %s207
      %s224 = sphi 0, %s208
    $region4: #{tpu_custom_call.1} parent=1 // loop_header_branch
      %24 = sbr.rel (%p22) target = $region8
    $region5: #{tpu_custom_call.1} parent=1 // loop_body
      %s26 = ssub.s32 %s21, 1
      %s27 = ssub.s32 %s21, 2
      %s34 = sadd.s32 1, %s29
      %p35 = scmp.ge.s32.totalorder %s34, 1
      %s36 = scalar_select %p35, 0, %s34
      %s37 = sadd.s32 1, %s28
      %s38 = scalar_select %p35, %s37, %s28
      %p39 = scmp.ge.s32.totalorder %s38, 2
      %s40 = scalar_select %p39, 0, %s38
      %s41 = ssub.s32 %s28, %s40
      %p42 = scmp.eq.s32.totalorder %s41, 0
      %s44 = sadd.s32 %s43, 1
      %s45 = scalar_select %p42, %s43, %s44
      %p48 = pneg %p42
      %p49 = scmp.eq.s32.totalorder %s21, 1
      %p50 = por %p48, %p49
      %p51 = scmp.ne.s32.totalorder %s43, %s46
      %p52 = scmp.eq.s32.totalorder %s21, 0
      %p53 = por %p51, %p52
      %p54 = scmp.ne.s32.totalorder %s43, %s46
      %p55 = scmp.eq.s32.totalorder %s26, 1
      %p56 = por %p54, %p55
      %p57 = scmp.ne.s32.totalorder %s46, %s47
      %p58 = scmp.eq.s32.totalorder %s26, 0
      %p59 = por %p57, %p58
      %p60 = scmp.ne.s32.totalorder %s46, %s47
      %p61 = scmp.eq.s32.totalorder %s27, 1
      %p62 = por %p60, %p61
      %p64 = scmp.ne.s32.totalorder %s47, %s63
      %p65 = scmp.eq.s32.totalorder %s27, 0
      %p66 = por %p64, %p65
      %s68 = sadd.s32 %s67, 1
      %p71 = scmp.eq.s32.totalorder %s21, 1
      %p72 = scmp.ne.s32.totalorder %s67, %s69
      %p73 = scmp.eq.s32.totalorder %s21, 0
      %p74 = por %p72, %p73
      %p75 = scmp.ne.s32.totalorder %s67, %s69
      %p76 = scmp.eq.s32.totalorder %s26, 1
      %p77 = por %p75, %p76
      %p78 = scmp.ne.s32.totalorder %s69, %s70
      %p79 = scmp.eq.s32.totalorder %s26, 0
      %p80 = por %p78, %p79
      %p81 = scmp.ne.s32.totalorder %s69, %s70
      %p82 = scmp.eq.s32.totalorder %s27, 1
      %p83 = por %p81, %p82
      %p85 = scmp.ne.s32.totalorder %s70, %s84
      %p86 = scmp.eq.s32.totalorder %s27, 0
      %p87 = por %p85, %p86
      %s89 = sadd.s32 %s88, 1
      %p92 = scmp.eq.s32.totalorder %s21, 1
      %p93 = scmp.ne.s32.totalorder %s88, %s90
      %p94 = scmp.eq.s32.totalorder %s21, 0
      %p95 = por %p93, %p94
      %p96 = scmp.ne.s32.totalorder %s88, %s90
      %p97 = scmp.eq.s32.totalorder %s26, 1
      %p98 = por %p96, %p97
      %p99 = scmp.ne.s32.totalorder %s90, %s91
      %p100 = scmp.eq.s32.totalorder %s26, 0
      %p101 = por %p99, %p100
      %p102 = scmp.ne.s32.totalorder %s90, %s91
      %p103 = scmp.eq.s32.totalorder %s27, 1
      %p104 = por %p102, %p103
      %p106 = scmp.ne.s32.totalorder %s91, %s105
      %p107 = scmp.eq.s32.totalorder %s27, 0
      %p108 = por %p106, %p107
      %s110 = sadd.s32 %s109, 1
      %p113 = scmp.eq.s32.totalorder %s21, 1
      %p114 = scmp.ne.s32.totalorder %s109, %s111
      %p115 = scmp.eq.s32.totalorder %s21, 0
      %p116 = por %p114, %p115
      %p117 = scmp.ne.s32.totalorder %s109, %s111
      %p118 = scmp.eq.s32.totalorder %s26, 1
      %p119 = por %p117, %p118
      %p120 = scmp.ne.s32.totalorder %s111, %s112
      %p121 = scmp.eq.s32.totalorder %s26, 0
      %p122 = por %p120, %p121
      %p123 = scmp.ne.s32.totalorder %s111, %s112
      %p124 = scmp.eq.s32.totalorder %s27, 1
      %p125 = por %p123, %p124
      %p127 = scmp.ne.s32.totalorder %s112, %s126
      %p128 = scmp.eq.s32.totalorder %s27, 0
      %p129 = por %p127, %p128
      %s131 = sadd.s32 %s130, 1
      %p134 = scmp.eq.s32.totalorder %s21, 1
      %p135 = scmp.ne.s32.totalorder %s130, %s132
      %p136 = scmp.eq.s32.totalorder %s21, 0
      %p137 = por %p135, %p136
      %p138 = scmp.ne.s32.totalorder %s130, %s132
      %p139 = scmp.eq.s32.totalorder %s26, 1
      %p140 = por %p138, %p139
      %p141 = scmp.ne.s32.totalorder %s132, %s133
      %p142 = scmp.eq.s32.totalorder %s26, 0
      %p143 = por %p141, %p142
      %p144 = scmp.ne.s32.totalorder %s132, %s133
      %p145 = scmp.eq.s32.totalorder %s27, 1
      %p146 = por %p144, %p145
      %p148 = scmp.ne.s32.totalorder %s133, %s147
      %p149 = scmp.eq.s32.totalorder %s27, 0
      %p150 = por %p148, %p149
      %s152 = sadd.s32 %s151, 1
      %p155 = scmp.eq.s32.totalorder %s21, 1
      %p156 = scmp.ne.s32.totalorder %s151, %s153
      %p157 = scmp.eq.s32.totalorder %s21, 0
      %p158 = por %p156, %p157
      %p159 = scmp.ne.s32.totalorder %s151, %s153
      %p160 = scmp.eq.s32.totalorder %s26, 1
      %p161 = por %p159, %p160
      %p162 = scmp.ne.s32.totalorder %s153, %s154
      %p163 = scmp.eq.s32.totalorder %s26, 0
      %p164 = por %p162, %p163
      %p165 = scmp.ne.s32.totalorder %s153, %s154
      %p166 = scmp.eq.s32.totalorder %s27, 1
      %p167 = por %p165, %p166
      %p169 = scmp.ne.s32.totalorder %s154, %s168
      %p170 = scmp.eq.s32.totalorder %s27, 0
      %p171 = por %p169, %p170
      %s172 = ssub.s32 %s28, %s40
      %s173 = ssub.s32 %s29, %s36
      %s174 = sor.u32 %s172, %s173
      %p175 = scmp.eq.s32.totalorder %s174, 0
      %s177 = sadd.s32 %s176, 1
      %s178 = scalar_select %p175, %s176, %s177
      %p181 = pneg %p175
      %p182 = scmp.eq.s32.totalorder %s21, 1
      %p183 = por %p181, %p182
      %p184 = scmp.ne.s32.totalorder %s176, %s179
      %p185 = scmp.eq.s32.totalorder %s21, 0
      %p186 = por %p184, %p185
      %p187 = scmp.ne.s32.totalorder %s176, %s179
      %p188 = scmp.eq.s32.totalorder %s26, 1
      %p189 = por %p187, %p188
      %p190 = scmp.ne.s32.totalorder %s179, %s180
      %p191 = scmp.eq.s32.totalorder %s26, 0
      %p192 = por %p190, %p191
      %p193 = scmp.ne.s32.totalorder %s179, %s180
      %p194 = scmp.eq.s32.totalorder %s27, 1
      %p195 = por %p193, %p194
      %p197 = scmp.ne.s32.totalorder %s180, %s196
      %p198 = scmp.eq.s32.totalorder %s27, 0
      %p199 = por %p197, %p198
      %s200 = ssub.s32 %s28, %s40
      %s201 = ssub.s32 %s29, %s36
      %s202 = sor.u32 %s200, %s201
      %p203 = scmp.eq.s32.totalorder %s202, 0
      %s205 = sadd.s32 %s204, 1
      %s206 = scalar_select %p203, %s204, %s205
      %p209 = pneg %p203
      %p210 = scmp.eq.s32.totalorder %s21, 1
      %p211 = por %p209, %p210
      %p212 = scmp.ne.s32.totalorder %s204, %s207
      %p213 = scmp.eq.s32.totalorder %s21, 0
      %p214 = por %p212, %p213
      %p215 = scmp.ne.s32.totalorder %s204, %s207
      %p216 = scmp.eq.s32.totalorder %s26, 1
      %p217 = por %p215, %p216
      %p218 = scmp.ne.s32.totalorder %s207, %s208
      %p219 = scmp.eq.s32.totalorder %s26, 0
      %p220 = por %p218, %p219
      %p221 = scmp.ne.s32.totalorder %s207, %s208
      %p222 = scmp.eq.s32.totalorder %s27, 1
      %p223 = por %p221, %p222
      %p225 = scmp.ne.s32.totalorder %s208, %s224
      %p226 = scmp.eq.s32.totalorder %s27, 0
      %p227 = por %p225, %p226
      %p228 = scmp.le.s32.totalorder 1, %s21
      %p229 = scmp.lt.s32.totalorder %s21, 3
      %p230 = pnand %p228, %p229
      %p231 = pneg %p230
      // Predicated region
      $region9: #{tpu_custom_call.1} parent=5 // pred_check
        _
      $region10: #{tpu_custom_call.1} parent=5 // pred_check_branch
        %233 = sbr.rel (%p230) target = $region12
      $region11: #{tpu_custom_call.1} parent=5 // pred_region
        %s234 = ssub.s32 %s21, 1
        // Predicated region
        $region13: #{tpu_custom_call.1} parent=11 // pred_check
          %p235 = pneg %p80
        $region14: #{tpu_custom_call.1} parent=11 // pred_check_branch
          %237 = sbr.rel (%p235) target = $region16
        $region15: #{tpu_custom_call.1} parent=11 // pred_region
          %239 = vsyncadd [#allocation6], 0
          %s240 = sshll.u32 %s1, 4
          %s241 = int_to_ptr.hbm [resolvable:$true] %s240
          %s242 = sshll.u32 [#allocation5], 4
          %s243 = int_to_ptr.vmem [resolvable:$true] %s242
          %248 = dma.hbm_to_vmem [thread:$0]  %s241, 256, %s243, [#allocation6], 64, 64, 4
        $region16: #{tpu_custom_call.1} parent=11 // pred_fallthru
          _
        // Predicated region
        $region17: #{tpu_custom_call.1} parent=11 // pred_check
          %p249 = pneg %p101
        $region18: #{tpu_custom_call.1} parent=11 // pred_check_branch
          %251 = sbr.rel (%p249) target = $region20
        $region19: #{tpu_custom_call.1} parent=11 // pred_region
          %253 = vsyncadd [#allocation6], 0
          %s254 = sshll.u32 %s2, 4
          %s255 = int_to_ptr.hbm [resolvable:$true] %s254
          %s256 = sshll.u32 [#allocation7], 4
          %s257 = int_to_ptr.vmem [resolvable:$true] %s256
          %262 = dma.hbm_to_vmem [thread:$0]  %s255, 256, %s257, [#allocation6], 64, 64, 4
        $region20: #{tpu_custom_call.1} parent=11 // pred_fallthru
          _
        // Predicated region
        $region21: #{tpu_custom_call.1} parent=11 // pred_check
          %p263 = pneg %p122
        $region22: #{tpu_custom_call.1} parent=11 // pred_check_branch
          %265 = sbr.rel (%p263) target = $region24
        $region23: #{tpu_custom_call.1} parent=11 // pred_region
          %267 = vsyncadd [#allocation9], 0
          %s268 = sshll.u32 %s3, 4
          %s269 = int_to_ptr.hbm [resolvable:$true] %s268
          %s270 = sshll.u32 [#allocation8], 4
          %s271 = int_to_ptr.vmem [resolvable:$true] %s270
          %276 = dma.hbm_to_vmem [thread:$0]  %s269, 256, %s271, [#allocation9], 64, 64, 4
        $region24: #{tpu_custom_call.1} parent=11 // pred_fallthru
          _
        // Predicated region
        $region25: #{tpu_custom_call.1} parent=11 // pred_check
          %p277 = pneg %p143
        $region26: #{tpu_custom_call.1} parent=11 // pred_check_branch
          %279 = sbr.rel (%p277) target = $region28
        $region27: #{tpu_custom_call.1} parent=11 // pred_region
          _
        $region28: #{tpu_custom_call.1} parent=11 // pred_fallthru
          _
        // Predicated region
        $region29: #{tpu_custom_call.1} parent=11 // pred_check
          %p280 = pneg %p164
        $region30: #{tpu_custom_call.1} parent=11 // pred_check_branch
          %282 = sbr.rel (%p280) target = $region32
        $region31: #{tpu_custom_call.1} parent=11 // pred_region
          _
        $region32: #{tpu_custom_call.1} parent=11 // pred_fallthru
          _
      $region12: #{tpu_custom_call.1} parent=5 // pred_fallthru
        _
      %p283 = scmp.lt.s32.totalorder %s21, 2
      // Predicated region
      $region33: #{tpu_custom_call.1} parent=5 // pred_check
        %p284 = pneg %p283
      $region34: #{tpu_custom_call.1} parent=5 // pred_check_branch
        %286 = sbr.rel (%p284) target = $region36
      $region35: #{tpu_custom_call.1} parent=5 // pred_region
        // Predicated region
        $region37: #{tpu_custom_call.1} parent=35 // pred_check
          %p287 = pneg %p53
        $region38: #{tpu_custom_call.1} parent=35 // pred_check_branch
          %289 = sbr.rel (%p287) target = $region40
        $region39: #{tpu_custom_call.1} parent=35 // pred_region
          %s290 = sand.u32 %s21, 1
          %s291 = scalar_lea.sflag [#allocation3], %s290
          %s292 = sand.u32 %s43, 1
          %s293 = smul.addr %s292, 8
          %s294 = scalar_lea.vmem [#allocation2], %s293
          %296 = vsyncadd %s291, 0
          %s297 = smul.addr %s28, 8
          %s298 = scalar_lea.hbm %s0, %s297
          %s300 = sshll.u32 %s298, 4
          %s301 = int_to_ptr.hbm [resolvable:$true] %s300
          %s302 = sshll.u32 %s294, 4
          %s303 = int_to_ptr.vmem [resolvable:$true] %s302
          %305 = dma.hbm_to_vmem [thread:$0]  %s301, 128, %s303, %s291
        $region40: #{tpu_custom_call.1} parent=35 // pred_fallthru
          _
        // Predicated region
        $region41: #{tpu_custom_call.1} parent=35 // pred_check
          %p306 = pneg %p186
        $region42: #{tpu_custom_call.1} parent=35 // pred_check_branch
          %308 = sbr.rel (%p306) target = $region44
        $region43: #{tpu_custom_call.1} parent=35 // pred_region
          %s309 = sand.u32 %s21, 1
          %s310 = scalar_lea.sflag [#allocation3], %s309
          %s311 = sand.u32 %s176, 1
          %s312 = smul.addr %s311, 4
          %s313 = scalar_lea.vmem [#allocation10], %s312
          %315 = vsyncadd %s310, 0
          %s316 = sadd.s32 %s29, %s28
          %s317 = smul.addr %s316, 4
          %s318 = scalar_lea.hbm %s6, %s317
          %s320 = sshll.u32 %s318, 4
          %s321 = int_to_ptr.hbm [resolvable:$true] %s320
          %s322 = sshll.u32 %s313, 4
          %s323 = int_to_ptr.vmem [resolvable:$true] %s322
          %325 = dma.hbm_to_vmem [thread:$0]  %s321, 64, %s323, %s310
        $region44: #{tpu_custom_call.1} parent=35 // pred_fallthru
          _
      $region36: #{tpu_custom_call.1} parent=5 // pred_fallthru
        _
      %p326 = scmp.le.s32.totalorder 1, %s21
      %p327 = scmp.lt.s32.totalorder %s21, 3
      %p328 = pnand %p326, %p327
      %p329 = pneg %p328
      // Predicated region
      $region45: #{tpu_custom_call.1} parent=5 // pred_check
        _
      $region46: #{tpu_custom_call.1} parent=5 // pred_check_branch
        %331 = sbr.rel (%p328) target = $region48
      $region47: #{tpu_custom_call.1} parent=5 // pred_region
        %s332 = ssub.s32 %s21, 1
        %s333 = sand.u32 %s26, 1
        %s334 = scalar_lea.sflag [#allocation3], %s333
        %s335 = sand.u32 %s46, 1
        %s336 = smul.addr %s335, 8
        %s337 = scalar_lea.vmem [#allocation2], %s336
        // Predicated region
        $region49: #{tpu_custom_call.1} parent=47 // pred_check
          %p338 = pneg %p59
        $region50: #{tpu_custom_call.1} parent=47 // pred_check_branch
          %340 = sbr.rel (%p338) target = $region52
        $region51: #{tpu_custom_call.1} parent=47 // pred_region
          %342 = dma.done %s334, 128
        $region52: #{tpu_custom_call.1} parent=47 // pred_fallthru
          _
        // Predicated region
        $region53: #{tpu_custom_call.1} parent=47 // pred_check
          %p343 = pneg %p80
        $region54: #{tpu_custom_call.1} parent=47 // pred_check_branch
          %345 = sbr.rel (%p343) target = $region56
        $region55: #{tpu_custom_call.1} parent=47 // pred_region
          %347 = dma.done [#allocation6], 256
        $region56: #{tpu_custom_call.1} parent=47 // pred_fallthru
          _
        // Predicated region
        $region57: #{tpu_custom_call.1} parent=47 // pred_check
          %p348 = pneg %p101
        $region58: #{tpu_custom_call.1} parent=47 // pred_check_branch
          %350 = sbr.rel (%p348) target = $region60
        $region59: #{tpu_custom_call.1} parent=47 // pred_region
          %352 = dma.done [#allocation6], 256
        $region60: #{tpu_custom_call.1} parent=47 // pred_fallthru
          _
        // Predicated region
        $region61: #{tpu_custom_call.1} parent=47 // pred_check
          %p353 = pneg %p122
        $region62: #{tpu_custom_call.1} parent=47 // pred_check_branch
          %355 = sbr.rel (%p353) target = $region64
        $region63: #{tpu_custom_call.1} parent=47 // pred_region
          %357 = dma.done [#allocation9], 256
        $region64: #{tpu_custom_call.1} parent=47 // pred_fallthru
          _
        %s358 = sand.u32 %s26, 1
        %s359 = scalar_lea.sflag [#allocation3], %s358
        %s360 = sand.u32 %s179, 1
        %s361 = smul.addr %s360, 4
        %s362 = scalar_lea.vmem [#allocation10], %s361
        // Predicated region
        $region65: #{tpu_custom_call.1} parent=47 // pred_check
          %p363 = pneg %p192
        $region66: #{tpu_custom_call.1} parent=47 // pred_check_branch
          %365 = sbr.rel (%p363) target = $region68
        $region67: #{tpu_custom_call.1} parent=47 // pred_region
          %367 = dma.done %s359, 64
        $region68: #{tpu_custom_call.1} parent=47 // pred_fallthru
          _
        %s368 = sand.u32 %s26, 1
        %s369 = scalar_lea.sflag [#allocation3], %s368
        %s370 = sand.u32 %s46, 1
        %s371 = smul.addr %s370, 8
        %s372 = scalar_lea.vmem [#allocation2], %s371
        %p373 = pneg %p59
        %p374 = pneg %p56
        %p375 = pneg %p80
        %p376 = pneg %p77
        %p377 = pneg %p101
        %p378 = pneg %p98
        %p379 = pneg %p122
        %p380 = pneg %p119
        %p381 = pneg %p143
        %p382 = pneg %p140
        %p383 = pneg %p164
        %p384 = pneg %p161
        %s385 = sand.u32 %s26, 1
        %s386 = scalar_lea.sflag [#allocation3], %s385
        %s387 = sand.u32 %s179, 1
        %s388 = smul.addr %s387, 4
        %s389 = scalar_lea.vmem [#allocation10], %s388
        %p390 = pneg %p192
        %p391 = pneg %p189
        %p392 = pneg %p220
        %p393 = pneg %p217
        %s394 = sand.u32 %s207, 1
        %s395 = scalar_lea.sflag [#allocation4], %s394
        %s396 = sand.u32 %s207, 1
        %s397 = smul.addr %s396, 8
        %s398 = scalar_lea.vmem [#allocation11], %s397
        %v400 = vld [vmem:[%s337] sm:$0xff]
        %v401 = vpack.c.bf16 %v400, %v400
        %s402 = smul.u32 %s31, 8
        %s403 = scalar_lea.vmem %s337, %s402 [#allocation2]
        %v404 = vld [vmem:[%s403] sm:$0xff]
        %v405 = vpack.c.bf16 %v404, %v404
        %v406 = vld [vmem:[#allocation5] sm:$0xf]
        %v407 = vld [vmem:[#allocation5 + $0x4] sm:$0xf]
        %v408 = vld [vmem:[#allocation5 + $0x8] sm:$0xf]
        %v409 = vld [vmem:[#allocation5 + $0xc] sm:$0xf]
        %v410 = vld [vmem:[#allocation7] sm:$0xf]
        %v411 = vld [vmem:[#allocation7 + $0x4] sm:$0xf]
        %v412 = vld [vmem:[#allocation7 + $0x8] sm:$0xf]
        %v413 = vld [vmem:[#allocation7 + $0xc] sm:$0xf]
        %v414 = vld [vmem:[#allocation8] sm:$0xf]
        %v415 = vld [vmem:[#allocation8 + $0x4] sm:$0xf]
        %v416 = vld [vmem:[#allocation8 + $0x8] sm:$0xf]
        %v417 = vld [vmem:[#allocation8 + $0xc] sm:$0xf]
        %v418 = vld [vmem:[%s4] sm:$0x1]
        %v420 = vperm.slane %v418, 0
        %v426 = vunpack.c.l.b16 %v406
        %v427 = vunpack.c.l.b16 %v407
        %v428 = vunpack.c.l.b16 %v408
        %v429 = vunpack.c.l.b16 %v409
        %v430 = vpack.c.b16 %v427, %v426
        %v431 = vpack.c.b16 %v429, %v428
        %vm434 = vcmask 261120
        %v436 = vsel %vm434, %v405, 0
        %438 = vmatpush.bf16.msra.mxu0 0
        %439 = vmatpush.bf16.msra.mxu0 0
        %440 = vmatpush.bf16.msra.mxu0 0
        %441 = vmatpush.bf16.msra.mxu0 0
        %442 = vmatpush.bf16.msra.mxu0 0
        %443 = vmatpush.bf16.msra.mxu0 0
        %444 = vmatpush.bf16.msra.mxu0 %v431
        %445 = vmatpush.bf16.msra.mxu0 %v430
        %446 = vmatmul.bf16.gmra.mxu0 %v436
        %v447 = vpop.f32.mrf.mxu0
        %v448 = vadd.f32 %v420, %v447
        %v449 = vpop.f32.mrf.mxu0
        %450 = vdwg.mxu0
        %v455 = vunpack.c.l.b16 %v410
        %v456 = vunpack.c.l.b16 %v411
        %v457 = vunpack.c.l.b16 %v412
        %v458 = vunpack.c.l.b16 %v413
        %v459 = vpack.c.b16 %v456, %v455
        %v460 = vpack.c.b16 %v458, %v457
        %v464 = vsel %vm434, %v401, 0
        %466 = vmatpush.bf16.msra.mxu0 0
        %467 = vmatpush.bf16.msra.mxu0 0
        %468 = vmatpush.bf16.msra.mxu0 0
        %469 = vmatpush.bf16.msra.mxu0 0
        %470 = vmatpush.bf16.msra.mxu0 0
        %471 = vmatpush.bf16.msra.mxu0 0
        %472 = vmatpush.bf16.msra.mxu0 %v460
        %473 = vmatpush.bf16.msra.mxu0 %v459
        %474 = vmatmul.bf16.gmra.mxu0 %v464
        %v475 = vpop.f32.mrf.mxu0
        %v476 = vadd.f32 0.0, %v475
        %v477 = vpop.f32.mrf.mxu0
        %478 = vdwg.mxu0
        %v479 = vld [vmem:[%s5] sm:$0x1]
        %v481 = vperm.slane %v479, 0
        %v487 = vunpack.c.l.b16 %v414
        %v488 = vunpack.c.l.b16 %v415
        %v489 = vunpack.c.l.b16 %v416
        %v490 = vunpack.c.l.b16 %v417
        %v491 = vpack.c.b16 %v488, %v487
        %v492 = vpack.c.b16 %v490, %v489
        %495 = vmatpush.bf16.msra.mxu0 0
        %496 = vmatpush.bf16.msra.mxu0 0
        %497 = vmatpush.bf16.msra.mxu0 0
        %498 = vmatpush.bf16.msra.mxu0 0
        %499 = vmatpush.bf16.msra.mxu0 0
        %500 = vmatpush.bf16.msra.mxu0 0
        %501 = vmatpush.bf16.msra.mxu0 %v492
        %502 = vmatpush.bf16.msra.mxu0 %v491
        %503 = vmatmul.bf16.gmra.mxu0 %v464
        %v504 = vpop.f32.mrf.mxu0
        %v505 = vadd.f32 %v481, %v504
        %v506 = vpop.f32.mrf.mxu0
        %507 = vdwg.mxu0
        %v508 = vld [vmem:[%s362] sm:$0xf]
        %v509 = vunpack.c.l.bf16 %v508
        %v510 = vsub.f32 1.0, %v509
        %v511 = vmul.f32 %v510, -10000.0
        %v512 = vmul.f32 %v448, 0.25
        %v513 = vpack.c.bf16 %v512, %v512
        %v514 = vpack.c.bf16 %v476, %v476
        %v515 = vpack.c.bf16 %v505, %v505
        %vm516 = vcmask 130048
        %v518 = vsel %vm516, %v513, 0
        %v521 = vsel %vm516, %v514, 0
        %523 = vmatpush.bf16.xpose.msra.mxu0 0
        %524 = vmatpush.bf16.xpose.msra.mxu0 0
        %525 = vmatpush.bf16.xpose.msra.mxu0 0
        %526 = vmatpush.bf16.xpose.msra.mxu0 0
        %527 = vmatpush.bf16.xpose.msra.mxu0 0
        %528 = vmatpush.bf16.xpose.msra.mxu0 0
        %529 = vmatpush.bf16.xpose.msra.mxu0 0
        %530 = vmatpush.bf16.xpose.msra.mxu0 %v521
        %531 = vmatmul.bf16.gmra.mxu0 %v518
        %v532 = vpop.f32.mrf.mxu0
        %v533 = vadd.f32 %v511, %v532
        %v534 = vpop.f32.mrf.mxu0
        %535 = vdwg.mxu0
        %vm536 = vcmask 64512
        %v537 = vsel %vm536, %v533, -inf
        %538 = vmax.xlane.f32.xlu0 %v537
        %v539 = vpop.xlane.xlu0 %538
        %v540 = vsub.f32 %v533, %v539
        %v541 = vmul.f32 %v540, 1.442695
        %v542 = vpow.pop %v541
        %v543 = vsel %vm536, %v542, 0.0
        %544 = vadd.xlane.f32.xlu0 %v543
        %v545 = vpop.xlane.xlu0 %544
        %v546 = vrcp.pop %v545
        %v547 = vmul.f32 %v542, %v546
        %v548 = vpack.c.bf16 %v547, %v547
        %v550 = vsel %vm536, %v548, 0
        %vm552 = vcmask 1043456
        %v554 = vsel %vm552, %v515, 0
        %556 = vmatpush.bf16.msra.mxu0 0
        %557 = vmatpush.bf16.msra.mxu0 0
        %558 = vmatpush.bf16.msra.mxu0 0
        %559 = vmatpush.bf16.msra.mxu0 0
        %560 = vmatpush.bf16.msra.mxu0 0
        %561 = vmatpush.bf16.msra.mxu0 0
        %562 = vmatpush.bf16.msra.mxu0 0
        %563 = vmatpush.bf16.msra.mxu0 %v554
        %564 = vmatmul.bf16.gmra.mxu0 %v550
        %v565 = vpop.f32.mrf.mxu0
        %v566 = vadd.f32 0.0, %v565
        %v567 = vpop.f32.mrf.mxu0
        %568 = vdwg.mxu0
        %570 = vrot.lane.b32.xlu0 %v513, 112
        %v571 = vpop.permute.xlu0 %570
        %573 = vrot.lane.b32.xlu0 %v514, 112
        %v574 = vpop.permute.xlu0 %573
        %v576 = vsel %vm516, %v571, 0
        %v579 = vsel %vm516, %v574, 0
        %581 = vmatpush.bf16.xpose.msra.mxu0 0
        %582 = vmatpush.bf16.xpose.msra.mxu0 0
        %583 = vmatpush.bf16.xpose.msra.mxu0 0
        %584 = vmatpush.bf16.xpose.msra.mxu0 0
        %585 = vmatpush.bf16.xpose.msra.mxu0 0
        %586 = vmatpush.bf16.xpose.msra.mxu0 0
        %587 = vmatpush.bf16.xpose.msra.mxu0 0
        %588 = vmatpush.bf16.xpose.msra.mxu0 %v579
        %589 = vmatmul.bf16.gmra.mxu0 %v576
        %v590 = vpop.f32.mrf.mxu0
        %v591 = vadd.f32 %v511, %v590
        %v592 = vpop.f32.mrf.mxu0
        %593 = vdwg.mxu0
        %v594 = vsel %vm536, %v591, -inf
        %595 = vmax.xlane.f32.xlu0 %v594
        %v596 = vpop.xlane.xlu0 %595
        %v597 = vsub.f32 %v591, %v596
        %v598 = vmul.f32 %v597, 1.442695
        %v599 = vpow.pop %v598
        %v600 = vsel %vm536, %v599, 0.0
        %601 = vadd.xlane.f32.xlu0 %v600
        %v602 = vpop.xlane.xlu0 %601
        %v603 = vrcp.pop %v602
        %v604 = vmul.f32 %v599, %v603
        %v605 = vpack.c.bf16 %v604, %v604
        %607 = vrot.lane.b32.xlu0 %v515, 112
        %v608 = vpop.permute.xlu0 %607
        %v610 = vsel %vm536, %v605, 0
        %v613 = vsel %vm552, %v608, 0
        %615 = vmatpush.bf16.msra.mxu0 0
        %616 = vmatpush.bf16.msra.mxu0 0
        %617 = vmatpush.bf16.msra.mxu0 0
        %618 = vmatpush.bf16.msra.mxu0 0
        %619 = vmatpush.bf16.msra.mxu0 0
        %620 = vmatpush.bf16.msra.mxu0 0
        %621 = vmatpush.bf16.msra.mxu0 0
        %622 = vmatpush.bf16.msra.mxu0 %v613
        %623 = vmatmul.bf16.gmra.mxu0 %v610
        %v624 = vpop.f32.mrf.mxu0
        %v625 = vadd.f32 0.0, %v624
        %v626 = vpop.f32.mrf.mxu0
        %627 = vdwg.mxu0
        %629 = vrot.lane.b32.xlu0 %v625, 16
        %v630 = vpop.permute.xlu0 %629
        %v632 = vsel %vm516, %v566, %v630
        %633 = vst.msk [vmem:[%s398] sm:$0xff] %vm434, %v632
        %s634 = sand.u32 %s207, 1
        %s635 = scalar_lea.sflag [#allocation4], %s634
        %s636 = sand.u32 %s207, 1
        %s637 = smul.addr %s636, 8
        %s638 = scalar_lea.vmem [#allocation11], %s637
        // Predicated region
        $region69: #{tpu_custom_call.1} parent=47 // pred_check
          %p639 = pneg %p217
        $region70: #{tpu_custom_call.1} parent=47 // pred_check_branch
          %641 = sbr.rel (%p639) target = $region72
        $region71: #{tpu_custom_call.1} parent=47 // pred_region
          %643 = vsyncadd %s635, 0
          %s644 = sadd.s32 %s31, %s30
          %s645 = smul.addr %s644, 8
          %s646 = scalar_lea.hbm %s7, %s645
          %s648 = sshll.u32 %s638, 4
          %s649 = int_to_ptr.vmem [resolvable:$true] %s648
          %s650 = sshll.u32 %s646, 4
          %s651 = int_to_ptr.hbm [resolvable:$true] %s650
          %653 = dma.vmem_to_hbm [thread:$0]  %s649, 128, %s651, %s635
        $region72: #{tpu_custom_call.1} parent=47 // pred_fallthru
          _
      $region48: #{tpu_custom_call.1} parent=5 // pred_fallthru
        _
      %p654 = scmp.le.s32.totalorder 2, %s21
      // Predicated region
      $region73: #{tpu_custom_call.1} parent=5 // pred_check
        %p655 = pneg %p654
      $region74: #{tpu_custom_call.1} parent=5 // pred_check_branch
        %657 = sbr.rel (%p655) target = $region76
      $region75: #{tpu_custom_call.1} parent=5 // pred_region
        %s658 = ssub.s32 %s21, 2
        // Predicated region
        $region77: #{tpu_custom_call.1} parent=75 // pred_check
          %p659 = pneg %p223
        $region78: #{tpu_custom_call.1} parent=75 // pred_check_branch
          %661 = sbr.rel (%p659) target = $region80
        $region79: #{tpu_custom_call.1} parent=75 // pred_region
          %s662 = sand.u32 %s208, 1
          %s663 = scalar_lea.sflag [#allocation4], %s662
          %s664 = sand.u32 %s208, 1
          %s665 = smul.addr %s664, 8
          %s666 = scalar_lea.vmem [#allocation11], %s665
          %668 = dma.done %s663, 128
        $region80: #{tpu_custom_call.1} parent=75 // pred_fallthru
          _
      $region76: #{tpu_custom_call.1} parent=5 // pred_fallthru
        _
    $region6: #{tpu_custom_call.1} parent=1 // loop_footer
      %s25 = sadd.s32 1, %s21
    $region7: #{tpu_custom_call.1} parent=1 // loop_footer_branch
      %20 = sbr.rel target = $region3
    $region8: #{tpu_custom_call.1} parent=1 // loop_exit
      _
    %669 = vsyncpa [#allocation3], 1
    %s670 = scalar_lea.sflag [#allocation3], 1
    %671 = vsyncpa %s670, 1
    %672 = vsyncpa [#allocation6], 1
    %673 = vsyncpa [#allocation9], 1
    %674 = vsyncpa [#allocation4], 1
    %s675 = scalar_lea.sflag [#allocation4], 1
    %676 = vsyncpa %s675, 1

</llo_original>
